<compile_context>
chip_gen: v6e
topology: v6e:2x2x1
jax: 0.10.0
libtpu: 0.0.40
codegen_flags: <defaults>
</compile_context>

<pallas_src>
import jax
import jax.numpy as jnp
from jax import lax
from jax.experimental import pallas as pl
from jax.experimental.pallas import tpu as pltpu


def _round_up(x, m):
    return ((x + m - 1) // m) * m


# ----------------------------- score kernel ---------------------------------
def _score_kernel(x_ref, w1_ref, b1_ref, w2_ref, s_ref):
    # x_ref:  (TILE, D)      VMEM (f32 or bf16)
    # w1_ref: (D, DH_pad)    VMEM (f32 or bf16)
    # b1_ref: (1, DH_pad)    VMEM f32
    # w2_ref: (1, DH_pad)    VMEM f32 (second Linear's weight, stored as a row)
    # s_ref:  (1, TILE)      VMEM f32 — lane-dense score output
    h = jnp.dot(x_ref[...], w1_ref[...], preferred_element_type=jnp.float32)
    h = jnp.maximum(h + b1_ref[...], 0.0)          # bias + ReLU on the VPU
    # Linear(DH, 1) as multiply + lane reduce (VPU/XLU) instead of an MXU
    # matmul with a single output column.  b2 is intentionally omitted: a
    # uniform shift cannot change top-k ordering.
    s_ref[0, :] = jnp.sum(h * w2_ref[...], axis=-1)


def score_patches(x2d, w1, b1, w2, *, tile_rows=512, use_bf16=False):
    """x2d: [B*N, D] f32; w1: [D, DH]; b1: [*, DH]; w2: [DH, 1] -> scores [B*N] f32."""
    bn, d = x2d.shape
    dh = w1.shape[1]

    b1_row = jnp.asarray(b1).reshape(1, dh).astype(jnp.float32)
    w2_row = jnp.asarray(w2).reshape(1, dh).astype(jnp.float32)

    # Zero-pad DH to a lane / MXU-friendly width (exact: padded columns of h
    # are ReLU(0 + 0) = 0 and multiply zero entries of w2).  Weights are read
    # once, so the extra HBM cost is negligible.
    lane_mult = 256 if dh > 128 else 128           # 256 matches v6e/v7x MXU tiles
    dh_pad = _round_up(dh, lane_mult)
    if dh_pad != dh:
        w1 = jnp.pad(w1, ((0, 0), (0, dh_pad - dh)))
        b1_row = jnp.pad(b1_row, ((0, 0), (0, dh_pad - dh)))
        w2_row = jnp.pad(w2_row, ((0, 0), (0, dh_pad - dh)))

    if use_bf16:
        # Recommended on v5e (f32 MXU is multi-pass) and to halve x HBM reads
        # on v7x.  Precision risk is limited to near-tie reordering in top_k.
        x2d = x2d.astype(jnp.bfloat16)
        w1 = w1.astype(jnp.bfloat16)

    # Large row tile; no padding of x — the grid just runs off the end of the
    # array on the last block and those garbage scores are sliced away below.
    tile_rows = max(8, min(tile_rows, _round_up(bn, 8)))
    num_tiles = pl.cdiv(bn, tile_rows)

    x_item = jnp.dtype(x2d.dtype).itemsize
    w_item = jnp.dtype(w1.dtype).itemsize
    footprint = (2 * tile_rows * d * x_item        # double-buffered x tile
                 + 2 * d * dh_pad * w_item         # resident weight (2 bufs)
                 + 4 * dh_pad * 4                  # b1 + w2 rows (2 bufs each)
                 + 2 * tile_rows * 4)              # output blocks
    vmem_limit = min(128 * 1024 * 1024,
                     max(32 * 1024 * 1024, int(footprint * 1.5) + (4 << 20)))

    cost = pl.CostEstimate(
        flops=2 * bn * d * dh_pad + 3 * bn * dh_pad,
        transcendentals=0,
        bytes_accessed=bn * d * x_item + d * dh_pad * w_item
        + 2 * dh_pad * 4 + num_tiles * tile_rows * 4,
    )

    out = pl.pallas_call(
        _score_kernel,
        out_shape=jax.ShapeDtypeStruct((num_tiles, tile_rows), jnp.float32),
        grid_spec=pltpu.PrefetchScalarGridSpec(
            num_scalar_prefetch=0,
            grid=(num_tiles,),
            in_specs=[
                pl.BlockSpec((tile_rows, d), lambda i: (i, 0)),
                pl.BlockSpec((d, dh_pad), lambda i: (0, 0)),
                pl.BlockSpec((1, dh_pad), lambda i: (0, 0)),
                pl.BlockSpec((1, dh_pad), lambda i: (0, 0)),
            ],
            out_specs=pl.BlockSpec((1, tile_rows), lambda i: (i, 0)),
        ),
        compiler_params=pltpu.CompilerParams(
            dimension_semantics=("parallel",),     # row tiles are independent
            vmem_limit_bytes=vmem_limit),
        cost_estimate=cost,
    )(x2d, w1, b1_row, w2_row)
    return out.reshape(num_tiles * tile_rows)[:bn]


# ----------------------------- gather kernel --------------------------------
def gather_topk(x2d, topk_indices, n):
    """x2d: [B*N, D]; topk_indices: [B, K] int32 (values in [0, N)) -> [B, K, D].

    One batch per grid step: K row-sized DMAs from HBM straight into the
    (1, K, D) output block, all in flight on separate semaphores.
    """
    bn, d = x2d.shape
    b, k = topk_indices.shape

    def kernel(idx_ref, x_hbm, out_ref, sems):
        # idx_ref: SMEM (B, K) int32 (scalar-prefetched)
        # x_hbm:   (B*N, D) raw HBM ref (memory_space=pl.ANY)
        # out_ref: (1, K, D) VMEM output block for this batch
        # sems:    DMA semaphores, one per selected row
        bi = pl.program_id(0)
        copies = []
        for j in range(k):                       # static unroll; K is modest
            row = bi * n + idx_ref[bi, j]
            cp = pltpu.make_async_copy(x_hbm.at[row], out_ref.at[0, j],
                                       sems.at[j])
            cp.start()
            copies.append(cp)
        for cp in copies:
            cp.wait()

    cost = pl.CostEstimate(
        flops=0,
        transcendentals=0,
        bytes_accessed=2 * b * k * d * jnp.dtype(x2d.dtype).itemsize + b * k * 4,
    )

    return pl.pallas_call(
        kernel,
        out_shape=jax.ShapeDtypeStruct((b, k, d), x2d.dtype),
        grid_spec=pltpu.PrefetchScalarGridSpec(
            num_scalar_prefetch=1,
            grid=(b,),
            in_specs=[pl.BlockSpec(memory_space=pl.ANY)],   # x stays in HBM
            out_specs=pl.BlockSpec((1, k, d), lambda bi, idx: (bi, 0, 0)),
            scratch_shapes=[pltpu.SemaphoreType.DMA((k,))],
        ),
        compiler_params=pltpu.CompilerParams(
            dimension_semantics=("parallel",)),  # batches are independent
        cost_estimate=cost,
    )(topk_indices, x2d)


# ----------------------------- full module ----------------------------------
def priority_scorer(x, params, keep_ratio=0.5, *, use_bf16=False,
                    tile_rows=512, use_pallas_gather=True):
    """Matches PriorityScorer.forward: returns (selected_x [B,K,D], topk_indices [B,K])."""
    b, n, d = x.shape
    w1, b1, w2, b2 = params
    del b2  # uniform shift; cannot change top-k ordering (dropped per review)

    x2d = x.reshape(b * n, d)                   # free reshape, shared by both kernels
    scores = score_patches(x2d, w1, b1, w2,
                           tile_rows=tile_rows, use_bf16=use_bf16).reshape(b, n)

    k = int(n * keep_ratio)
    # TODO(synk): torch.topk (sort/selection) has no clean Pallas equivalent; use lax.top_k.
    _, topk_indices = lax.top_k(scores, k)
    topk_indices = topk_indices.astype(jnp.int32)

    if use_pallas_gather:
        selected_x = gather_topk(x2d, topk_indices, n)
    else:
        # XLA-gather fallback — benchmark both and keep the winner.
        selected_x = jnp.take_along_axis(x, topk_indices[..., None], axis=1)
    return selected_x, topk_indices


def init_params(key, embed_dim):
    dh = embed_dim // 2
    k1, k2, k3, k4 = jax.random.split(key, 4)
    # Deterministic synthetic init (shapes match nn.Linear(D, D//2) / nn.Linear(D//2, 1)),
    # stored transposed so the kernel computes x @ W.
    w1 = jax.random.normal(k1, (embed_dim, dh), jnp.float32) * 0.1
    b1 = jax.random.normal(k2, (1, dh), jnp.float32) * 0.1
    w2 = jax.random.normal(k3, (dh, 1), jnp.float32) * 0.1
    b2 = jax.random.normal(k4, (1, 1), jnp.float32) * 0.1
    return w1, b1, w2, b2


if __name__ == "__main__":
    B, N, D = 2, 8, 32
    keep_ratio = 0.5

    key = jax.random.PRNGKey(0)
    kx, kp = jax.random.split(key)
    x = jax.random.normal(kx, (B, N, D), jnp.float32)
    params = init_params(kp, D)

    selected_x, topk_idx = priority_scorer(x, params, keep_ratio)
    selected_x = jax.block_until_ready(selected_x)
    topk_idx = jax.block_until_ready(topk_idx)

    # Pure-JAX reference check (full module, including b2 — b2 cannot change
    # the top-k ordering, so indices/rows must agree exactly).
    w1, b1, w2, b2 = params
    h_ref = jnp.maximum(x @ w1 + b1.reshape(-1), 0.0)
    scores_ref = (h_ref @ w2 + b2.reshape(-1)).squeeze(-1)
    _, idx_ref = lax.top_k(scores_ref, int(N * keep_ratio))
    sel_ref = jnp.take_along_axis(x, idx_ref[..., None], axis=1)

    assert selected_x.shape == (B, int(N * keep_ratio), D)
    assert topk_idx.shape == (B, int(N * keep_ratio))
    assert jnp.array_equal(topk_idx, idx_ref.astype(jnp.int32))
    assert jnp.allclose(selected_x, sel_ref, atol=1e-5)

    print("KERNEL_OK")
</pallas_src>

<mosaic_0001>
module attributes {stable_mosaic.version = 11 : i64} {
  func.func @_score_kernel(%arg0: i32, %arg1: memref<16x32xf32, #tpu.memory_space<vmem>>, %arg2: memref<32x128xf32, #tpu.memory_space<vmem>>, %arg3: memref<1x128xf32, #tpu.memory_space<vmem>>, %arg4: memref<1x128xf32, #tpu.memory_space<vmem>>, %arg5: memref<1x16xf32, #tpu.memory_space<vmem>>) attributes {dimension_semantics = [#tpu.dimension_semantics<parallel>], iteration_bounds = array<i64: 1>, scalar_prefetch = 0 : i64, scratch_operands = 0 : i64, tpu.core_type = #tpu.core_type<tc>, window_params = [{transform_indices = @transform_0, window_bounds = array<i64: 16, 32>}, {pipeline_mode = #tpu.pipeline_mode<synchronous>, transform_indices = @transform_1, window_bounds = array<i64: 32, 128>}, {pipeline_mode = #tpu.pipeline_mode<synchronous>, transform_indices = @transform_2, window_bounds = array<i64: 1, 128>}, {pipeline_mode = #tpu.pipeline_mode<synchronous>, transform_indices = @transform_3, window_bounds = array<i64: 1, 128>}, {transform_indices = @transform_4, window_bounds = array<i64: 1, 16>}]} {
    %c0 = arith.constant 0 : index
    %c0_0 = arith.constant 0 : index
    %0 = vector.load %arg1[%c0, %c0_0] : memref<16x32xf32, #tpu.memory_space<vmem>>, vector<16x32xf32>
    %c0_1 = arith.constant 0 : index
    %c0_2 = arith.constant 0 : index
    %1 = vector.load %arg2[%c0_1, %c0_2] : memref<32x128xf32, #tpu.memory_space<vmem>>, vector<32x128xf32>
    %cst = arith.constant dense<0.000000e+00> : vector<16x128xf32>
    %2 = tpu.matmul %0, %1, %cst {dimension_numbers = #tpu.dot_dimension_numbers<[1], [0], [0], [1], [0, 0, 1, 1], [], []>} : vector<16x32xf32>, vector<32x128xf32>, vector<16x128xf32> -> vector<16x128xf32>
    %c0_3 = arith.constant 0 : index
    %c0_4 = arith.constant 0 : index
    %3 = vector.load %arg3[%c0_3, %c0_4] : memref<1x128xf32, #tpu.memory_space<vmem>>, vector<1x128xf32>
    %4 = vector.broadcast %3 : vector<1x128xf32> to vector<16x128xf32>
    %5 = arith.addf %2, %4 : vector<16x128xf32>
    %cst_5 = arith.constant 0.000000e+00 : f32
    %6 = vector.broadcast %cst_5 : f32 to vector<16x128xf32>
    %7 = arith.maximumf %5, %6 : vector<16x128xf32>
    %c0_6 = arith.constant 0 : index
    %c0_7 = arith.constant 0 : index
    %8 = vector.load %arg4[%c0_6, %c0_7] : memref<1x128xf32, #tpu.memory_space<vmem>>, vector<1x128xf32>
    %9 = vector.broadcast %8 : vector<1x128xf32> to vector<16x128xf32>
    %10 = arith.mulf %7, %9 : vector<16x128xf32>
    %cst_8 = arith.constant dense<0.000000e+00> : vector<16xf32>
    %11 = vector.multi_reduction <add>, %10, %cst_8 [1] : vector<16x128xf32> to vector<16xf32>
    %c0_9 = arith.constant 0 : index
    %c0_10 = arith.constant 0 : index
    %12 = vector.load %arg5[%c0_9, %c0_10] : memref<1x16xf32, #tpu.memory_space<vmem>>, vector<1x16xf32>
    %13 = vector.shape_cast %12 : vector<1x16xf32> to vector<16xf32>
    %14 = vector.shape_cast %11 : vector<16xf32> to vector<1x16xf32>
    tpu.vector_store %arg5[%c0_9, %c0_10], %14 {strides = array<i32>} : memref<1x16xf32, #tpu.memory_space<vmem>>, vector<1x16xf32>,
    return
  }
  func.func @transform_0(%arg0: i32) -> (i32, i32) {
    %c0_i32 = arith.constant 0 : i32
    %c0_i32_0 = arith.constant 0 : i32
    return %arg0, %c0_i32 : i32, i32
  }
  func.func @transform_1(%arg0: i32) -> (i32, i32) {
    %c0_i32 = arith.constant 0 : i32
    %c0_i32_0 = arith.constant 0 : i32
    %c0_i32_1 = arith.constant 0 : i32
    return %c0_i32, %c0_i32_0 : i32, i32
  }
  func.func @transform_2(%arg0: i32) -> (i32, i32) {
    %c0_i32 = arith.constant 0 : i32
    %c0_i32_0 = arith.constant 0 : i32
    %c0_i32_1 = arith.constant 0 : i32
    return %c0_i32, %c0_i32_0 : i32, i32
  }
  func.func @transform_3(%arg0: i32) -> (i32, i32) {
    %c0_i32 = arith.constant 0 : i32
    %c0_i32_0 = arith.constant 0 : i32
    %c0_i32_1 = arith.constant 0 : i32
    return %c0_i32, %c0_i32_0 : i32, i32
  }
  func.func @transform_4(%arg0: i32) -> (i32, i32) {
    %c0_i32 = arith.constant 0 : i32
    %c0_i32_0 = arith.constant 0 : i32
    return %arg0, %c0_i32 : i32, i32
  }
}

</mosaic_0001>

<llo_original>
// kernel: tpu_custom_call.1
$region0: #{tpu_custom_call.1}
  #allocation0 [shape = 'u32[]', space=smem, size = 0x4, offset = 0x4, fixed_abs, tag = 'smem constant byte address 0x4 - core index']
  #allocation1 [shape = 'u32[144,128]{1,0:T(1,128)}', space=vmem, size = 0x12000, scoped, tag = 'internal scratch']
  %s0 = inlined_call_operand.hbm [shape: f32[16,32], index: 0, kind: input, shape index: {}]
  %s1 = inlined_call_operand.hbm [shape: f32[32,128], index: 1, kind: input, shape index: {}]
  %s2 = inlined_call_operand.vmem [shape: f32[1,128], index: 2, kind: input, shape index: {}]
  %s3 = inlined_call_operand.vmem [shape: f32[1,128], index: 3, kind: input, shape index: {}]
  %s4 = inlined_call_operand.hbm [shape: f32[1,16], index: 4, kind: output, shape index: {}]
  %s5 = sld [smem:[#allocation0]]
  $region34: #{tpu_custom_call.1} parent=0
    _
  %s7 = ssub.s32 1, %s5
  %s8 = scalar_select 0, %s7, %s5
  $region1: #{tpu_custom_call.1} parent=0
    #allocation2 [shape = 'u8[8192]{0}', space=vmem, size = 0x2000, scoped, tag = 'input window, operand 0, single buffered']
    #allocation3 [shape = 's32[1]{0}', space=sflag, size = 0x4, scoped, tag = 'scoped memory for tpu_custom_call.1']
    #allocation4 [shape = 's32[1]{0}', space=sflag, size = 0x4, scoped, tag = 'scoped memory for tpu_custom_call.1']
    #allocation5 [shape = 'u8[16384]{0}', space=vmem, size = 0x4000, scoped, tag = 'input window, operand 1, single buffered']
    #allocation6 [shape = 's32[1]{0}', space=sflag, size = 0x4, scoped, tag = 'scoped memory for tpu_custom_call.1']
    #allocation7 [shape = 'u8[512]{0}', space=vmem, size = 0x400, scoped, tag = 'output window, operand 0, single buffered']
    %9 = vsyncpa [#allocation3], 0
    %10 = vsyncpa [#allocation6], 0
    %11 = vsyncpa [#allocation4], 0
    // Predicated region
    $region2: #{tpu_custom_call.1} parent=1 // pred_check
      _
    $region3: #{tpu_custom_call.1} parent=1 // pred_check_branch
      %13 = sbr.rel (0) target = $region5
    $region4: #{tpu_custom_call.1} parent=1 // pred_region
      %s15 = ssub.s32 256, 256
      %16 = vsyncadd [#allocation3], %s15
      %s17 = sshll.u32 [#allocation2], 4
      %s18 = int_to_ptr.vmem [resolvable:$true] %s17
      %23 = dma.hbm_to_vmem [thread:$0]  %s0, 256, %s18, [#allocation3], 128, 128, 8
    $region5: #{tpu_custom_call.1} parent=1 // pred_fallthru
      _
    // Predicated region
    $region6: #{tpu_custom_call.1} parent=1 // pred_check
      _
    $region7: #{tpu_custom_call.1} parent=1 // pred_check_branch
      %25 = sbr.rel (0) target = $region9
    $region8: #{tpu_custom_call.1} parent=1 // pred_region
      %s27 = ssub.s32 512, 512
      %28 = vsyncadd [#allocation6], %s27
      %s29 = sshll.u32 [#allocation5], 4
      %s30 = int_to_ptr.vmem [resolvable:$true] %s29
      %35 = dma.hbm_to_vmem [thread:$0]  %s1, 512, %s30, [#allocation6], 128, 128, 8
    $region9: #{tpu_custom_call.1} parent=1 // pred_fallthru
      _
    // Predicated region
    $region10: #{tpu_custom_call.1} parent=1 // pred_check
      _
    $region11: #{tpu_custom_call.1} parent=1 // pred_check_branch
      %37 = sbr.rel (0) target = $region13
    $region12: #{tpu_custom_call.1} parent=1 // pred_region
      _
    $region13: #{tpu_custom_call.1} parent=1 // pred_fallthru
      _
    // Predicated region
    $region14: #{tpu_custom_call.1} parent=1 // pred_check
      _
    $region15: #{tpu_custom_call.1} parent=1 // pred_check_branch
      %39 = sbr.rel (0) target = $region17
    $region16: #{tpu_custom_call.1} parent=1 // pred_region
      _
    $region17: #{tpu_custom_call.1} parent=1 // pred_fallthru
      _
    // Predicated region
    $region18: #{tpu_custom_call.1} parent=1 // pred_check
      _
    $region19: #{tpu_custom_call.1} parent=1 // pred_check_branch
      %41 = sbr.rel (0) target = $region21
    $region20: #{tpu_custom_call.1} parent=1 // pred_region
      %42 = dma.done [#allocation3], 256
    $region21: #{tpu_custom_call.1} parent=1 // pred_fallthru
      _
    // Predicated region
    $region22: #{tpu_custom_call.1} parent=1 // pred_check
      _
    $region23: #{tpu_custom_call.1} parent=1 // pred_check_branch
      %44 = sbr.rel (0) target = $region25
    $region24: #{tpu_custom_call.1} parent=1 // pred_region
      %45 = dma.done [#allocation6], 512
    $region25: #{tpu_custom_call.1} parent=1 // pred_fallthru
      _
    %v46 = vld [vmem:[#allocation2] sm:$0xff]
    %v47 = vld [vmem:[#allocation2 + $0x8] sm:$0xff]
    %v48 = vld [vmem:[#allocation5] sm:$0xff]
    %v49 = vld [vmem:[#allocation5 + $0x8] sm:$0xff]
    %v50 = vld [vmem:[#allocation5 + $0x10] sm:$0xff]
    %v51 = vld [vmem:[#allocation5 + $0x18] sm:$0xff]
    %v52 = vld [vmem:[%s2] sm:$0x1]
    %v54 = vlaneseq
    %v55 = vshrl.u32 %v54, 7
    %v56 = vsub.s32 0, %v55
    %v57 = vrot.slane %v52, %v56
    %vm59 = vcmask 261120
    %v61 = vsel %vm59, %v46, 0
    %v64 = vsel %vm59, %v47, 0
    %66 = vmatprep.subr.mxu0 0.0
    %67 = vmatpush1.msra.mxu0 0.0
    %68 = vmatprep.subr.mxu0 0.0
    %69 = vmatpush1.msra.mxu0 0.0
    %70 = vmatprep.subr.mxu0 0.0
    %71 = vmatpush1.msra.mxu0 0.0
    %72 = vmatprep.subr.mxu0 0.0
    %73 = vmatpush1.msra.mxu0 0.0
    %74 = vmatprep.subr.mxu0 0.0
    %75 = vmatpush1.msra.mxu0 0.0
    %76 = vmatprep.subr.mxu0 0.0
    %77 = vmatpush1.msra.mxu0 0.0
    %78 = vmatprep.subr.mxu0 0.0
    %79 = vmatpush1.msra.mxu0 0.0
    %80 = vmatprep.subr.mxu0 0.0
    %81 = vmatpush1.msra.mxu0 0.0
    %82 = vmatprep.subr.mxu0 0.0
    %83 = vmatpush1.msra.mxu0 0.0
    %84 = vmatprep.subr.mxu0 0.0
    %85 = vmatpush1.msra.mxu0 0.0
    %86 = vmatprep.subr.mxu0 0.0
    %87 = vmatpush1.msra.mxu0 0.0
    %88 = vmatprep.subr.mxu0 0.0
    %89 = vmatpush1.msra.mxu0 0.0
    %90 = vmatprep.subr.mxu0 0.0
    %91 = vmatpush1.msra.mxu0 %v51
    %92 = vmatprep.subr.mxu0 0.0
    %93 = vmatpush1.msra.mxu0 %v50
    %94 = vmatprep.subr.mxu0 0.0
    %95 = vmatpush1.msra.mxu0 %v49
    %96 = vmatprep.subr.mxu0 0.0
    %97 = vmatpush1.msra.mxu0 %v48
    %98 = vmatprep.subr.mxu0 0.0
    %99 = vmatpush2.msra.mxu0 0.0
    %100 = vmatprep.subr.mxu0 0.0
    %101 = vmatpush2.msra.mxu0 0.0
    %102 = vmatprep.subr.mxu0 0.0
    %103 = vmatpush2.msra.mxu0 0.0
    %104 = vmatprep.subr.mxu0 0.0
    %105 = vmatpush2.msra.mxu0 0.0
    %106 = vmatprep.subr.mxu0 0.0
    %107 = vmatpush2.msra.mxu0 0.0
    %108 = vmatprep.subr.mxu0 0.0
    %109 = vmatpush2.msra.mxu0 0.0
    %110 = vmatprep.subr.mxu0 0.0
    %111 = vmatpush2.msra.mxu0 0.0
    %112 = vmatprep.subr.mxu0 0.0
    %113 = vmatpush2.msra.mxu0 0.0
    %114 = vmatprep.subr.mxu0 0.0
    %115 = vmatpush2.msra.mxu0 0.0
    %116 = vmatprep.subr.mxu0 0.0
    %117 = vmatpush2.msra.mxu0 0.0
    %118 = vmatprep.subr.mxu0 0.0
    %119 = vmatpush2.msra.mxu0 0.0
    %120 = vmatprep.subr.mxu0 0.0
    %121 = vmatpush2.msra.mxu0 0.0
    %122 = vmatprep.subr.mxu0 0.0
    %123 = vmatpush2.msra.mxu0 0.0
    %124 = vmatprep.subr.mxu0 0.0
    %125 = vmatpush2.msra.mxu0 0.0
    %126 = vmatprep.subr.mxu0 0.0
    %127 = vmatpush2.msra.mxu0 0.0
    %128 = vmatprep.subr.mxu0 0.0
    %129 = vmatpush2.msra.mxu0 0.0
    %130 = vmatprep.mubr.f32.mxu0 0.0
    %131 = vmatmul.mubr.f32.gmra.mxu0 %v61
    %v132 = vpop.f32.mrf.mxu0
    %v133 = vadd.f32 %v57, %v132
    %v134 = vpop.f32.mrf.mxu0
    %135 = vmatprep.mubr.f32.mxu0 0.0
    %136 = vmatmul.mubr.f32.gmra.mxu0 %v64
    %v137 = vpop.f32.mrf.mxu0
    %v138 = vadd.f32 %v57, %v137
    %v139 = vpop.f32.mrf.mxu0
    %140 = vdwg.mxu0
    %v141 = vmax.f32 %v133, 0.0
    %v142 = vmax.f32 %v138, 0.0
    %v143 = vld [vmem:[%s3] sm:$0x1]
    %v145 = vlaneseq
    %v146 = vshrl.u32 %v145, 7
    %v147 = vsub.s32 0, %v146
    %v148 = vrot.slane %v143, %v147
    %v150 = vmul.f32 %v141, %v148
    %v151 = vmul.f32 %v142, %v148
    %152 = vadd.xlane.f32.xlu0 %v150
    %v153 = vpop.xlane.xlu0 %152
    %154 = vadd.xlane.f32.xlu0 %v151
    %v155 = vpop.xlane.xlu0 %154
    %v158 = vlaneseq
    %v159 = vand.u32 %v158, 127
    %v160 = vlaneseq
    %v161 = vshrl.u32 %v160, 7
    %v162 = vsub.s32 %v159, %v161
    %v163 = vrot.slane %v153, %v162
    %v164 = vadd.s32 %v159, 4294967288
    %v165 = vlaneseq
    %v166 = vshrl.u32 %v165, 7
    %v167 = vsub.s32 %v164, %v166
    %v168 = vrot.slane %v155, %v167
    %vm169 = vcmask 130112
    %v170 = vsel %vm169, %v168, %v163
    %vm172 = vcmask 122880
    %173 = vst.msk [vmem:[#allocation7] sm:$0x1] %vm172, %v170
    // Predicated region
    $region26: #{tpu_custom_call.1} parent=1 // pred_check
      _
    $region27: #{tpu_custom_call.1} parent=1 // pred_check_branch
      %175 = sbr.rel (0) target = $region29
    $region28: #{tpu_custom_call.1} parent=1 // pred_region
      %s177 = ssub.s32 16, 16
      %178 = vsyncadd [#allocation4], %s177
      %s180 = sshll.u32 [#allocation7], 4
      %s181 = int_to_ptr.vmem [resolvable:$true] %s180
      %183 = dma.vmem_to_hbm [thread:$0]  %s181, 16, %s4, [#allocation4]
    $region29: #{tpu_custom_call.1} parent=1 // pred_fallthru
      _
    // Predicated region
    $region30: #{tpu_custom_call.1} parent=1 // pred_check
      _
    $region31: #{tpu_custom_call.1} parent=1 // pred_check_branch
      %185 = sbr.rel (0) target = $region33
    $region32: #{tpu_custom_call.1} parent=1 // pred_region
      %186 = dma.done [#allocation4], 16
    $region33: #{tpu_custom_call.1} parent=1 // pred_fallthru
      _
    %187 = vsyncpa [#allocation3], 1
    %188 = vsyncpa [#allocation6], 1
    %189 = vsyncpa [#allocation4], 1

</llo_original>
